<compile_context>
chip_gen: v5e
topology: v5e:2x2
jax: 0.10.0
libtpu: 0.0.40
codegen_flags: <defaults>
</compile_context>

<pallas_src>
import functools

import jax
import jax.numpy as jnp
from jax.experimental import pallas as pl
from jax.experimental.pallas import tpu as pltpu


# ----------------------------------------------------------------------------
# Kernel 1: pooled features + squeeze MLP -> per-axis gates
# ----------------------------------------------------------------------------
def _pool_squeeze_kernel(inv_h, inv_w,
                         xf_ref, eht_ref, ewt_ref,
                         w1_ref, b1_ref, w2_ref, b2_ref,
                         gate_h_ref, gate_w_ref,
                         row_acc, col_acc):
    """Grid (B, HW-tiles): accumulate row/col sums across HW tiles, then run the
    tiny channel MLP at the last tile and emit the per-axis gates."""
    t = pl.program_id(1)
    n_t = pl.num_programs(1)

    @pl.when(t == 0)
    def _init():
        row_acc[...] = jnp.zeros_like(row_acc)
        col_acc[...] = jnp.zeros_like(col_acc)

    xb = xf_ref[0].astype(jnp.float32)                      # (C, HW_blk) lane-dense
    # row sums (sum over W for each height i) -> (C, H)
    row_acc[...] += jnp.dot(xb, eht_ref[...], preferred_element_type=jnp.float32)
    # col sums (sum over H for each width  j) -> (C, W)
    col_acc[...] += jnp.dot(xb, ewt_ref[...], preferred_element_type=jnp.float32)

    @pl.when(t == n_t - 1)
    def _finalize():
        row_mean = row_acc[...] * inv_w                     # pooled over W, (C, H)
        col_mean = col_acc[...] * inv_h                     # pooled over H, (C, W)

        def squeeze(v):                                     # v: (C, L) -> (C2, L)
            z = jnp.dot(w1_ref[...], v, preferred_element_type=jnp.float32) + b1_ref[...]
            z = z * jnp.clip(z + 3.0, 0.0, 6.0) * (1.0 / 6.0)          # Hardswish
            a = jnp.dot(w2_ref[...], z, preferred_element_type=jnp.float32) + b2_ref[...]
            return jax.nn.sigmoid(a)

        # As in the reference (H == W): the gate applied along H comes from the
        # pooled-over-H branch, the gate applied along W from the pooled-over-W one.
        gate_h_ref[0] = squeeze(col_mean).astype(gate_h_ref.dtype)      # (C2, H)
        gate_w_ref[0] = squeeze(row_mean).astype(gate_w_ref.dtype)      # (C2, W)


# ----------------------------------------------------------------------------
# Kernel 2: apply the rank-1 gates in the lane-dense flattened layout
# ----------------------------------------------------------------------------
def _apply_kernel(xf_ref, gate_h_ref, gate_w_ref, eh_ref, ew_ref, out_ref):
    gh = gate_h_ref[0]                                      # (C, H) f32
    gw = gate_w_ref[0]                                      # (C, W) f32
    # Expand gh[c, i] / gw[c, j] onto flattened positions p = i*W + j of this tile
    # via constant 0/1 selector matmuls (no in-kernel reshape / gather needed).
    gh_e = jnp.dot(gh, eh_ref[...], preferred_element_type=jnp.float32)   # (C, HW_blk)
    gw_e = jnp.dot(gw, ew_ref[...], preferred_element_type=jnp.float32)   # (C, HW_blk)
    out_ref[0] = (xf_ref[0].astype(jnp.float32) * gh_e * gw_e).astype(out_ref.dtype)


# ----------------------------------------------------------------------------
# Wrapper
# ----------------------------------------------------------------------------
def _pick_hw_tile(hw, cap):
    """Largest lane-dense (multiple-of-128) divisor of hw that is <= cap, else hw
    itself (a full-extent block is always a legal block shape)."""
    if hw <= cap:
        return hw
    lane_dense = [d for d in range(128, cap + 1, 128) if hw % d == 0]
    return max(lane_dense) if lane_dense else hw


def ca_forward(x, params):
    """Pallas TPU equivalent of CA.forward (eval-mode BatchNorm)."""
    B, C, H, W = x.shape
    assert H == W, "CA reference forward only lines up for H == W"
    HW = H * W

    w1 = jnp.asarray(params["conv_w"], jnp.float32)         # (c_mid, C)   1x1 conv
    b1 = jnp.asarray(params["conv_b"], jnp.float32)         # (c_mid,)
    gamma = jnp.asarray(params["bn_gamma"], jnp.float32)
    beta = jnp.asarray(params["bn_beta"], jnp.float32)
    mean = jnp.asarray(params["bn_mean"], jnp.float32)
    var = jnp.asarray(params["bn_var"], jnp.float32)
    eps = float(params["bn_eps"])
    w2 = jnp.asarray(params["conv_w_w"], jnp.float32)       # (C2, c_mid)  conv_w head
    b2 = jnp.asarray(params["conv_w_b"], jnp.float32)       # (C2,)

    c_mid = w1.shape[0]
    C2 = w2.shape[0]
    assert C2 == C, "final broadcast x * y_h * y_w requires c2 == c1"

    # Fold eval-mode BatchNorm into the first 1x1 conv.
    scale = gamma * jax.lax.rsqrt(var + eps)
    w1f = w1 * scale[:, None]
    b1f = ((b1 - mean) * scale + beta).reshape(c_mid, 1)
    b2f = b2.reshape(C2, 1)

    # Lane-dense flattened view of x (free reshape: contiguous minor dims).
    xf = x.reshape(B, C, HW)
    itemsize = jnp.dtype(x.dtype).itemsize
    # ~4 MiB x-block budget (double-buffered in+out stays well inside 32 MiB scoped
    # VMEM even on v7x), rounded to lane-dense tiles.
    cap = max(128, ((4 * 1024 * 1024) // (C * itemsize) // 128) * 128)
    hw_blk = _pick_hw_tile(HW, cap)
    n_t = HW // hw_blk

    # Constant 0/1 selector matrices mapping flattened position p = i*W + j to its
    # height index i (e_h) and width index j (e_w).
    p = jnp.arange(HW)
    e_h = (p[None, :] // W == jnp.arange(H)[:, None]).astype(jnp.float32)   # (H, HW)
    e_w = (p[None, :] % W == jnp.arange(W)[:, None]).astype(jnp.float32)    # (W, HW)
    e_ht = e_h.T                                                            # (HW, H)
    e_wt = e_w.T                                                            # (HW, W)

    vmem_limit = 32 * 1024 * 1024

    # ------------------- kernel 1: pooling + squeeze MLP -------------------
    pool_cost = pl.CostEstimate(
        flops=int(2 * B * C * HW * (H + W)
                  + 2 * B * (H + W) * (c_mid * C + C2 * c_mid)),
        transcendentals=int(B * C2 * (H + W)),
        bytes_accessed=int(xf.size * itemsize + (e_ht.size + e_wt.size) * 4
                           + B * C2 * (H + W) * 4),
    )
    gate_h, gate_w = pl.pallas_call(
        functools.partial(_pool_squeeze_kernel, 1.0 / H, 1.0 / W),
        out_shape=(
            jax.ShapeDtypeStruct((B, C2, H), jnp.float32),
            jax.ShapeDtypeStruct((B, C2, W), jnp.float32),
        ),
        grid=(B, n_t),
        in_specs=[
            pl.BlockSpec((1, C, hw_blk), lambda b, t: (b, 0, t)),   # x (flattened)
            pl.BlockSpec((hw_blk, H), lambda b, t: (t, 0)),         # e_h^T
            pl.BlockSpec((hw_blk, W), lambda b, t: (t, 0)),         # e_w^T
            pl.BlockSpec((c_mid, C), lambda b, t: (0, 0)),          # conv1 (BN folded)
            pl.BlockSpec((c_mid, 1), lambda b, t: (0, 0)),
            pl.BlockSpec((C2, c_mid), lambda b, t: (0, 0)),         # conv_w head
            pl.BlockSpec((C2, 1), lambda b, t: (0, 0)),
        ],
        out_specs=(
            pl.BlockSpec((1, C2, H), lambda b, t: (b, 0, 0)),
            pl.BlockSpec((1, C2, W), lambda b, t: (b, 0, 0)),
        ),
        scratch_shapes=[
            pltpu.VMEM((C, H), jnp.float32),
            pltpu.VMEM((C, W), jnp.float32),
        ],
        compiler_params=pltpu.CompilerParams(
            dimension_semantics=("parallel", "arbitrary"),
            vmem_limit_bytes=vmem_limit,
        ),
        cost_estimate=pool_cost,
    )(xf, e_ht, e_wt, w1f, b1f, w2, b2f)

    # ------------------- kernel 2: apply the gates -------------------
    apply_cost = pl.CostEstimate(
        flops=int(2 * B * C * HW * (H + W) + 2 * B * C * HW),
        transcendentals=0,
        bytes_accessed=int(2 * xf.size * itemsize + (e_h.size + e_w.size) * 4
                           + B * C2 * (H + W) * 4),
    )
    out_flat = pl.pallas_call(
        _apply_kernel,
        out_shape=jax.ShapeDtypeStruct((B, C, HW), x.dtype),
        grid=(B, n_t),
        in_specs=[
            pl.BlockSpec((1, C, hw_blk), lambda b, t: (b, 0, t)),   # x (flattened)
            pl.BlockSpec((1, C2, H), lambda b, t: (b, 0, 0)),       # gate along H
            pl.BlockSpec((1, C2, W), lambda b, t: (b, 0, 0)),       # gate along W
            pl.BlockSpec((H, hw_blk), lambda b, t: (0, t)),         # e_h
            pl.BlockSpec((W, hw_blk), lambda b, t: (0, t)),         # e_w
        ],
        out_specs=pl.BlockSpec((1, C, hw_blk), lambda b, t: (b, 0, t)),
        compiler_params=pltpu.CompilerParams(
            dimension_semantics=("parallel", "parallel"),
            vmem_limit_bytes=vmem_limit,
        ),
        cost_estimate=apply_cost,
    )(xf, gate_h, gate_w, e_h, e_w)

    return out_flat.reshape(B, C, H, W)


# ----------------------------------------------------------------------------
# Pure-JAX reference (literal, typo-fixed transcription of CA.forward, eval BN)
# ----------------------------------------------------------------------------
def ca_reference(x, params):
    b, c, h, w = x.shape
    w1, b1 = params["conv_w"], params["conv_b"]
    gamma, beta = params["bn_gamma"], params["bn_beta"]
    mean, var, eps = params["bn_mean"], params["bn_var"], params["bn_eps"]
    w2, b2 = params["conv_w_w"], params["conv_w_b"]

    y_w = jnp.mean(x, axis=3, keepdims=True)                                  # (b,c,h,1)
    y_h = jnp.transpose(jnp.mean(x, axis=2, keepdims=True), (0, 1, 3, 2))     # (b,c,w,1)
    y = jnp.concatenate([y_h, y_w], axis=2)[..., 0]                           # (b,c,w+h)
    y = jnp.einsum("oc,bcl->bol", w1, y) + b1[None, :, None]                  # 1x1 conv
    y = (y - mean[None, :, None]) * jax.lax.rsqrt(var[None, :, None] + eps)
    y = y * gamma[None, :, None] + beta[None, :, None]                        # BN (eval)
    y = y * jnp.clip(y + 3.0, 0.0, 6.0) / 6.0                                 # Hardswish
    y_h2, y_w2 = y[:, :, :h], y[:, :, h:]                                     # split([h,w])
    a_h = jax.nn.sigmoid(jnp.einsum("oc,bcl->bol", w2, y_h2) + b2[None, :, None])
    a_w = jax.nn.sigmoid(jnp.einsum("oc,bcl->bol", w2, y_w2) + b2[None, :, None])
    return x * a_h[:, :, :, None] * a_w[:, :, None, :]


if __name__ == "__main__":
    key = jax.random.PRNGKey(0)
    ks = jax.random.split(key, 9)

    B, C1, H, W = 2, 8, 16, 16
    r = 2
    c_mid = min(8, C1 // r)          # = 4
    C2 = C1                          # required by the final broadcast multiply

    x = jax.random.normal(ks[0], (B, C1, H, W), dtype=jnp.float32)

    params = {
        "conv_w": 0.3 * jax.random.normal(ks[1], (c_mid, C1), jnp.float32),
        "conv_b": 0.1 * jax.random.normal(ks[2], (c_mid,), jnp.float32),
        "bn_gamma": 1.0 + 0.1 * jax.random.normal(ks[3], (c_mid,), jnp.float32),
        "bn_beta": 0.1 * jax.random.normal(ks[4], (c_mid,), jnp.float32),
        "bn_mean": 0.05 * jax.random.normal(ks[5], (c_mid,), jnp.float32),
        "bn_var": jnp.abs(1.0 + 0.1 * jax.random.normal(ks[6], (c_mid,), jnp.float32)),
        "bn_eps": 1e-5,
        "conv_w_w": 0.3 * jax.random.normal(ks[7], (C2, c_mid), jnp.float32),
        "conv_w_b": 0.1 * jax.random.normal(ks[8], (C2,), jnp.float32),
    }

    out = jax.block_until_ready(ca_forward(x, params))
    ref = jax.block_until_ready(ca_reference(x, params))

    assert out.shape == x.shape, out.shape
    assert out.dtype == x.dtype
    max_err = float(jnp.max(jnp.abs(out - ref)))
    assert max_err < 2e-4, f"max abs error {max_err}"

    print("KERNEL_OK")
</pallas_src>

<mosaic_0001>
module attributes {stable_mosaic.version = 11 : i64} {
  func.func @_pool_squeeze_kernel(%arg0: i32, %arg1: i32, %arg2: memref<1x8x256xf32, #tpu.memory_space<vmem>>, %arg3: memref<256x16xf32, #tpu.memory_space<vmem>>, %arg4: memref<256x16xf32, #tpu.memory_space<vmem>>, %arg5: memref<4x8xf32, #tpu.memory_space<vmem>>, %arg6: memref<4x1xf32, #tpu.memory_space<vmem>>, %arg7: memref<8x4xf32, #tpu.memory_space<vmem>>, %arg8: memref<8x1xf32, #tpu.memory_space<vmem>>, %arg9: memref<1x8x16xf32, #tpu.memory_space<vmem>>, %arg10: memref<1x8x16xf32, #tpu.memory_space<vmem>>, %arg11: memref<8x16xf32, #tpu.memory_space<vmem>>, %arg12: memref<8x16xf32, #tpu.memory_space<vmem>>) attributes {dimension_semantics = [#tpu.dimension_semantics<parallel>, #tpu.dimension_semantics<arbitrary>], iteration_bounds = array<i64: 2, 1>, scalar_prefetch = 0 : i64, scratch_operands = 2 : i64, tpu.core_type = #tpu.core_type<tc>, window_params = [{transform_indices = @transform_0, window_bounds = array<i64: 1, 8, 256>}, {transform_indices = @transform_1, window_bounds = array<i64: 256, 16>}, {transform_indices = @transform_2, window_bounds = array<i64: 256, 16>}, {pipeline_mode = #tpu.pipeline_mode<synchronous>, transform_indices = @transform_3, window_bounds = array<i64: 4, 8>}, {pipeline_mode = #tpu.pipeline_mode<synchronous>, transform_indices = @transform_4, window_bounds = array<i64: 4, 1>}, {pipeline_mode = #tpu.pipeline_mode<synchronous>, transform_indices = @transform_5, window_bounds = array<i64: 8, 4>}, {pipeline_mode = #tpu.pipeline_mode<synchronous>, transform_indices = @transform_6, window_bounds = array<i64: 8, 1>}, {transform_indices = @transform_7, window_bounds = array<i64: 1, 8, 16>}, {transform_indices = @transform_8, window_bounds = array<i64: 1, 8, 16>}]} {
    %c0_i32 = arith.constant 0 : i32
    %0 = arith.cmpi eq, %arg1, %c0_i32 : i32
    %1 = arith.extui %0 : i1 to i32
    %c0_i32_0 = arith.constant 0 : i32
    %2 = arith.cmpi ne, %1, %c0_i32_0 : i32
    scf.if %2 {
      %cst_18 = arith.constant 0.000000e+00 : f32
      %18 = vector.broadcast %cst_18 : f32 to vector<8x16xf32>
      %c0_19 = arith.constant 0 : index
      %c0_20 = arith.constant 0 : index
      %19 = vector.load %arg11[%c0_19, %c0_20] : memref<8x16xf32, #tpu.memory_space<vmem>>, vector<8x16xf32>
      tpu.vector_store %arg11[%c0_19, %c0_20], %18 {strides = array<i32>} : memref<8x16xf32, #tpu.memory_space<vmem>>, vector<8x16xf32>,
      %cst_21 = arith.constant 0.000000e+00 : f32
      %20 = vector.broadcast %cst_21 : f32 to vector<8x16xf32>
      %c0_22 = arith.constant 0 : index
      %c0_23 = arith.constant 0 : index
      %21 = vector.load %arg12[%c0_22, %c0_23] : memref<8x16xf32, #tpu.memory_space<vmem>>, vector<8x16xf32>
      tpu.vector_store %arg12[%c0_22, %c0_23], %20 {strides = array<i32>} : memref<8x16xf32, #tpu.memory_space<vmem>>, vector<8x16xf32>,
    } else {
    }
    %c0 = arith.constant 0 : index
    %c0_1 = arith.constant 0 : index
    %c0_2 = arith.constant 0 : index
    %3 = vector.load %arg2[%c0, %c0_1, %c0_2] : memref<1x8x256xf32, #tpu.memory_space<vmem>>, vector<1x8x256xf32>
    %4 = vector.shape_cast %3 : vector<1x8x256xf32> to vector<8x256xf32>
    %c0_3 = arith.constant 0 : index
    %c0_4 = arith.constant 0 : index
    %5 = vector.load %arg11[%c0_3, %c0_4] : memref<8x16xf32, #tpu.memory_space<vmem>>, vector<8x16xf32>
    %c0_5 = arith.constant 0 : index
    %c0_6 = arith.constant 0 : index
    %6 = vector.load %arg3[%c0_5, %c0_6] : memref<256x16xf32, #tpu.memory_space<vmem>>, vector<256x16xf32>
    %cst = arith.constant dense<0.000000e+00> : vector<8x16xf32>
    %7 = tpu.matmul %4, %6, %cst {dimension_numbers = #tpu.dot_dimension_numbers<[1], [0], [0], [1], [0, 0, 1, 1], [], []>} : vector<8x256xf32>, vector<256x16xf32>, vector<8x16xf32> -> vector<8x16xf32>
    %8 = arith.addf %5, %7 : vector<8x16xf32>
    %c0_7 = arith.constant 0 : index
    %c0_8 = arith.constant 0 : index
    %9 = vector.load %arg11[%c0_7, %c0_8] : memref<8x16xf32, #tpu.memory_space<vmem>>, vector<8x16xf32>
    tpu.vector_store %arg11[%c0_7, %c0_8], %8 {strides = array<i32>} : memref<8x16xf32, #tpu.memory_space<vmem>>, vector<8x16xf32>,
    %c0_9 = arith.constant 0 : index
    %c0_10 = arith.constant 0 : index
    %10 = vector.load %arg12[%c0_9, %c0_10] : memref<8x16xf32, #tpu.memory_space<vmem>>, vector<8x16xf32>
    %c0_11 = arith.constant 0 : index
    %c0_12 = arith.constant 0 : index
    %11 = vector.load %arg4[%c0_11, %c0_12] : memref<256x16xf32, #tpu.memory_space<vmem>>, vector<256x16xf32>
    %cst_13 = arith.constant dense<0.000000e+00> : vector<8x16xf32>
    %12 = tpu.matmul %4, %11, %cst_13 {dimension_numbers = #tpu.dot_dimension_numbers<[1], [0], [0], [1], [0, 0, 1, 1], [], []>} : vector<8x256xf32>, vector<256x16xf32>, vector<8x16xf32> -> vector<8x16xf32>
    %13 = arith.addf %10, %12 : vector<8x16xf32>
    %c0_14 = arith.constant 0 : index
    %c0_15 = arith.constant 0 : index
    %14 = vector.load %arg12[%c0_14, %c0_15] : memref<8x16xf32, #tpu.memory_space<vmem>>, vector<8x16xf32>
    tpu.vector_store %arg12[%c0_14, %c0_15], %13 {strides = array<i32>} : memref<8x16xf32, #tpu.memory_space<vmem>>, vector<8x16xf32>,
    %c0_i32_16 = arith.constant 0 : i32
    %15 = arith.cmpi eq, %arg1, %c0_i32_16 : i32
    %16 = arith.extui %15 : i1 to i32
    %c0_i32_17 = arith.constant 0 : i32
    %17 = arith.cmpi ne, %16, %c0_i32_17 : i32
    scf.if %17 {
      %c0_18 = arith.constant 0 : index
      %c0_19 = arith.constant 0 : index
      %18 = vector.load %arg11[%c0_18, %c0_19] : memref<8x16xf32, #tpu.memory_space<vmem>>, vector<8x16xf32>
      %cst_20 = arith.constant 6.250000e-02 : f32
      %19 = vector.broadcast %cst_20 : f32 to vector<8x16xf32>
      %20 = arith.mulf %18, %19 : vector<8x16xf32>
      %c0_21 = arith.constant 0 : index
      %c0_22 = arith.constant 0 : index
      %21 = vector.load %arg12[%c0_21, %c0_22] : memref<8x16xf32, #tpu.memory_space<vmem>>, vector<8x16xf32>
      %cst_23 = arith.constant 6.250000e-02 : f32
      %22 = vector.broadcast %cst_23 : f32 to vector<8x16xf32>
      %23 = arith.mulf %21, %22 : vector<8x16xf32>
      %c0_24 = arith.constant 0 : index
      %c0_25 = arith.constant 0 : index
      %24 = vector.load %arg5[%c0_24, %c0_25] : memref<4x8xf32, #tpu.memory_space<vmem>>, vector<4x8xf32>
      %cst_26 = arith.constant dense<0.000000e+00> : vector<4x16xf32>
      %25 = tpu.matmul %24, %23, %cst_26 {dimension_numbers = #tpu.dot_dimension_numbers<[1], [0], [0], [1], [0, 0, 1, 1], [], []>} : vector<4x8xf32>, vector<8x16xf32>, vector<4x16xf32> -> vector<4x16xf32>
      %c0_27 = arith.constant 0 : index
      %c0_28 = arith.constant 0 : index
      %26 = vector.load %arg6[%c0_27, %c0_28] : memref<4x1xf32, #tpu.memory_space<vmem>>, vector<4x1xf32>
      %27 = vector.broadcast %26 : vector<4x1xf32> to vector<4x16xf32>
      %28 = arith.addf %25, %27 : vector<4x16xf32>
      %cst_29 = arith.constant 3.000000e+00 : f32
      %29 = vector.broadcast %cst_29 : f32 to vector<4x16xf32>
      %30 = arith.addf %28, %29 : vector<4x16xf32>
      %cst_30 = arith.constant 0.000000e+00 : f32
      %cst_31 = arith.constant 6.000000e+00 : f32
      %31 = vector.broadcast %cst_30 : f32 to vector<4x16xf32>
      %32 = arith.maximumf %31, %30 : vector<4x16xf32>
      %33 = vector.broadcast %cst_31 : f32 to vector<4x16xf32>
      %34 = arith.minimumf %33, %32 : vector<4x16xf32>
      %35 = arith.mulf %28, %34 : vector<4x16xf32>
      %cst_32 = arith.constant 0.166666672 : f32
      %36 = vector.broadcast %cst_32 : f32 to vector<4x16xf32>
      %37 = arith.mulf %35, %36 : vector<4x16xf32>
      %c0_33 = arith.constant 0 : index
      %c0_34 = arith.constant 0 : index
      %38 = vector.load %arg7[%c0_33, %c0_34] : memref<8x4xf32, #tpu.memory_space<vmem>>, vector<8x4xf32>
      %cst_35 = arith.constant dense<0.000000e+00> : vector<8x16xf32>
      %39 = tpu.matmul %38, %37, %cst_35 {dimension_numbers = #tpu.dot_dimension_numbers<[1], [0], [0], [1], [0, 0, 1, 1], [], []>} : vector<8x4xf32>, vector<4x16xf32>, vector<8x16xf32> -> vector<8x16xf32>
      %c0_36 = arith.constant 0 : index
      %c0_37 = arith.constant 0 : index
      %40 = vector.load %arg8[%c0_36, %c0_37] : memref<8x1xf32, #tpu.memory_space<vmem>>, vector<8x1xf32>
      %41 = vector.broadcast %40 : vector<8x1xf32> to vector<8x16xf32>
      %42 = arith.addf %39, %41 : vector<8x16xf32>
      %43 = arith.negf %42 : vector<8x16xf32>
      %44 = math.exp %43 : vector<8x16xf32>
      %cst_38 = arith.constant 1.000000e+00 : f32
      %45 = vector.broadcast %cst_38 : f32 to vector<8x16xf32>
      %46 = arith.addf %45, %44 : vector<8x16xf32>
      %47 = arith.divf %45, %46 : vector<8x16xf32>
      %c0_39 = arith.constant 0 : index
      %c0_40 = arith.constant 0 : index
      %c0_41 = arith.constant 0 : index
      %48 = vector.load %arg9[%c0_39, %c0_40, %c0_41] : memref<1x8x16xf32, #tpu.memory_space<vmem>>, vector<1x8x16xf32>
      %49 = vector.shape_cast %48 : vector<1x8x16xf32> to vector<8x16xf32>
      %50 = vector.shape_cast %47 : vector<8x16xf32> to vector<1x8x16xf32>
      tpu.vector_store %arg9[%c0_39, %c0_40, %c0_41], %50 {strides = array<i32>} : memref<1x8x16xf32, #tpu.memory_space<vmem>>, vector<1x8x16xf32>,
      %c0_42 = arith.constant 0 : index
      %c0_43 = arith.constant 0 : index
      %51 = vector.load %arg5[%c0_42, %c0_43] : memref<4x8xf32, #tpu.memory_space<vmem>>, vector<4x8xf32>
      %cst_44 = arith.constant dense<0.000000e+00> : vector<4x16xf32>
      %52 = tpu.matmul %51, %20, %cst_44 {dimension_numbers = #tpu.dot_dimension_numbers<[1], [0], [0], [1], [0, 0, 1, 1], [], []>} : vector<4x8xf32>, vector<8x16xf32>, vector<4x16xf32> -> vector<4x16xf32>
      %c0_45 = arith.constant 0 : index
      %c0_46 = arith.constant 0 : index
      %53 = vector.load %arg6[%c0_45, %c0_46] : memref<4x1xf32, #tpu.memory_space<vmem>>, vector<4x1xf32>
      %54 = vector.broadcast %53 : vector<4x1xf32> to vector<4x16xf32>
      %55 = arith.addf %52, %54 : vector<4x16xf32>
      %cst_47 = arith.constant 3.000000e+00 : f32
      %56 = vector.broadcast %cst_47 : f32 to vector<4x16xf32>
      %57 = arith.addf %55, %56 : vector<4x16xf32>
      %cst_48 = arith.constant 0.000000e+00 : f32
      %cst_49 = arith.constant 6.000000e+00 : f32
      %58 = vector.broadcast %cst_48 : f32 to vector<4x16xf32>
      %59 = arith.maximumf %58, %57 : vector<4x16xf32>
      %60 = vector.broadcast %cst_49 : f32 to vector<4x16xf32>
      %61 = arith.minimumf %60, %59 : vector<4x16xf32>
      %62 = arith.mulf %55, %61 : vector<4x16xf32>
      %cst_50 = arith.constant 0.166666672 : f32
      %63 = vector.broadcast %cst_50 : f32 to vector<4x16xf32>
      %64 = arith.mulf %62, %63 : vector<4x16xf32>
      %c0_51 = arith.constant 0 : index
      %c0_52 = arith.constant 0 : index
      %65 = vector.load %arg7[%c0_51, %c0_52] : memref<8x4xf32, #tpu.memory_space<vmem>>, vector<8x4xf32>
      %cst_53 = arith.constant dense<0.000000e+00> : vector<8x16xf32>
      %66 = tpu.matmul %65, %64, %cst_53 {dimension_numbers = #tpu.dot_dimension_numbers<[1], [0], [0], [1], [0, 0, 1, 1], [], []>} : vector<8x4xf32>, vector<4x16xf32>, vector<8x16xf32> -> vector<8x16xf32>
      %c0_54 = arith.constant 0 : index
      %c0_55 = arith.constant 0 : index
      %67 = vector.load %arg8[%c0_54, %c0_55] : memref<8x1xf32, #tpu.memory_space<vmem>>, vector<8x1xf32>
      %68 = vector.broadcast %67 : vector<8x1xf32> to vector<8x16xf32>
      %69 = arith.addf %66, %68 : vector<8x16xf32>
      %70 = arith.negf %69 : vector<8x16xf32>
      %71 = math.exp %70 : vector<8x16xf32>
      %cst_56 = arith.constant 1.000000e+00 : f32
      %72 = vector.broadcast %cst_56 : f32 to vector<8x16xf32>
      %73 = arith.addf %72, %71 : vector<8x16xf32>
      %74 = arith.divf %72, %73 : vector<8x16xf32>
      %c0_57 = arith.constant 0 : index
      %c0_58 = arith.constant 0 : index
      %c0_59 = arith.constant 0 : index
      %75 = vector.load %arg10[%c0_57, %c0_58, %c0_59] : memref<1x8x16xf32, #tpu.memory_space<vmem>>, vector<1x8x16xf32>
      %76 = vector.shape_cast %75 : vector<1x8x16xf32> to vector<8x16xf32>
      %77 = vector.shape_cast %74 : vector<8x16xf32> to vector<1x8x16xf32>
      tpu.vector_store %arg10[%c0_57, %c0_58, %c0_59], %77 {strides = array<i32>} : memref<1x8x16xf32, #tpu.memory_space<vmem>>, vector<1x8x16xf32>,
    } else {
    }
    return
  }
  func.func @transform_0(%arg0: i32, %arg1: i32) -> (i32, i32, i32) {
    %c0_i32 = arith.constant 0 : i32
    %c0_i32_0 = arith.constant 0 : i32
    return %arg0, %c0_i32, %arg1 : i32, i32, i32
  }
  func.func @transform_1(%arg0: i32, %arg1: i32) -> (i32, i32) {
    %c0_i32 = arith.constant 0 : i32
    %c0_i32_0 = arith.constant 0 : i32
    return %arg1, %c0_i32 : i32, i32
  }
  func.func @transform_2(%arg0: i32, %arg1: i32) -> (i32, i32) {
    %c0_i32 = arith.constant 0 : i32
    %c0_i32_0 = arith.constant 0 : i32
    return %arg1, %c0_i32 : i32, i32
  }
  func.func @transform_3(%arg0: i32, %arg1: i32) -> (i32, i32) {
    %c0_i32 = arith.constant 0 : i32
    %c0_i32_0 = arith.constant 0 : i32
    %c0_i32_1 = arith.constant 0 : i32
    return %c0_i32, %c0_i32_0 : i32, i32
  }
  func.func @transform_4(%arg0: i32, %arg1: i32) -> (i32, i32) {
    %c0_i32 = arith.constant 0 : i32
    %c0_i32_0 = arith.constant 0 : i32
    %c0_i32_1 = arith.constant 0 : i32
    return %c0_i32, %c0_i32_0 : i32, i32
  }
  func.func @transform_5(%arg0: i32, %arg1: i32) -> (i32, i32) {
    %c0_i32 = arith.constant 0 : i32
    %c0_i32_0 = arith.constant 0 : i32
    %c0_i32_1 = arith.constant 0 : i32
    return %c0_i32, %c0_i32_0 : i32, i32
  }
  func.func @transform_6(%arg0: i32, %arg1: i32) -> (i32, i32) {
    %c0_i32 = arith.constant 0 : i32
    %c0_i32_0 = arith.constant 0 : i32
    %c0_i32_1 = arith.constant 0 : i32
    return %c0_i32, %c0_i32_0 : i32, i32
  }
  func.func @transform_7(%arg0: i32, %arg1: i32) -> (i32, i32, i32) {
    %c0_i32 = arith.constant 0 : i32
    %c0_i32_0 = arith.constant 0 : i32
    %c0_i32_1 = arith.constant 0 : i32
    return %arg0, %c0_i32, %c0_i32_0 : i32, i32, i32
  }
  func.func @transform_8(%arg0: i32, %arg1: i32) -> (i32, i32, i32) {
    %c0_i32 = arith.constant 0 : i32
    %c0_i32_0 = arith.constant 0 : i32
    %c0_i32_1 = arith.constant 0 : i32
    return %arg0, %c0_i32, %c0_i32_0 : i32, i32, i32
  }
}

</mosaic_0001>

<llo_original>
// kernel: tpu_custom_call.1
$region0: #{tpu_custom_call.1}
  #allocation0 [shape = 'u32[]', space=smem, size = 0x4, offset = 0x4, fixed_abs, tag = 'smem constant byte address 0x4 - core index']
  #allocation1 [shape = 'u32[72,128]{1,0:T(1,128)}', space=vmem, size = 0x9000, scoped, tag = 'internal scratch']
  #allocation2 [shape = 'f32[8,16]{1,0:T(8,128)}', space=vmem, size = 0x1000, scoped, tag = 'scratch operand']
  #allocation3 [shape = 'f32[8,16]{1,0:T(8,128)}', space=vmem, size = 0x1000, scoped, tag = 'scratch operand']
  %s0 = inlined_call_operand.vmem [shape: f32[2,8,256], index: 0, kind: input, shape index: {}]
  %s1 = inlined_call_operand.vmem [shape: f32[256,16], index: 1, kind: input, shape index: {}]
  %s2 = inlined_call_operand.vmem [shape: f32[256,16], index: 2, kind: input, shape index: {}]
  %s3 = inlined_call_operand.vmem [shape: f32[4,8], index: 3, kind: input, shape index: {}]
  %s4 = inlined_call_operand.vmem [shape: f32[4,1], index: 4, kind: input, shape index: {}]
  %s5 = inlined_call_operand.vmem [shape: f32[8,4], index: 5, kind: input, shape index: {}]
  %s6 = inlined_call_operand.vmem [shape: f32[8,1], index: 6, kind: input, shape index: {}]
  %s7 = inlined_call_operand.hbm [shape: f32[2,8,16], index: 7, kind: output, shape index: {0}]
  %s8 = inlined_call_operand.hbm [shape: f32[2,8,16], index: 8, kind: output, shape index: {1}]
  %9 = xla_tuple %s7, %s8
  %s10 = sld [smem:[#allocation0]]
  $region77: #{tpu_custom_call.1} parent=0
    _
  %s12 = ssub.s32 1, %s10
  %s13 = scalar_select 0, %s12, %s10
  $region1: #{tpu_custom_call.1} parent=0
    #allocation4 [shape = 'u8[8192]{0}', space=vmem, size = 0x2000, scoped, tag = 'output window, operand 0']
    #allocation5 [shape = 's32[2]{0}', space=sflag, size = 0x8, scoped, tag = 'scoped memory for tpu_custom_call.1']
    #allocation6 [shape = 'u8[8192]{0}', space=vmem, size = 0x2000, scoped, tag = 'output window, operand 1']
    #allocation7 [shape = 's32[2]{0}', space=sflag, size = 0x8, scoped, tag = 'scoped memory for tpu_custom_call.1']
    %14 = vsyncpa [#allocation5], 0
    %s15 = scalar_lea.sflag [#allocation5], 1
    %16 = vsyncpa %s15, 0
    %17 = vsyncpa [#allocation7], 0
    %s18 = scalar_lea.sflag [#allocation7], 1
    %19 = vsyncpa %s18, 0
    loop: start=0, step=1, limit=4
    $region2: #{tpu_custom_call.1} parent=1 // loop_pre_header
      _
    $region3: #{tpu_custom_call.1} parent=1 // loop_header
      %s21 = sphi 0, %s25
      %p22 = scmp.ge.s32.totalorder %s21, 4
      %s28 = sphi 0, %s40
      %s29 = sphi 0, %s36
      %s30 = sphi 0, %s28
      %s31 = sphi 0, %s29
      %s32 = sphi 0, %s30
      %s33 = sphi 0, %s31
      %s45 = sphi 0, %s47
      %s48 = sphi 0, %s45
      %s49 = sphi 0, %s48
      %s65 = sphi 0, %s49
      %s71 = sphi 0, %s73
      %s74 = sphi 0, %s71
      %s75 = sphi 0, %s74
      %s91 = sphi 0, %s75
      %s97 = sphi 0, %s99
      %s100 = sphi 0, %s97
      %s101 = sphi 0, %s100
      %s117 = sphi 0, %s101
      %s121 = sphi 0, %s121
      %s123 = sphi 0, %s121
      %s124 = sphi 0, %s123
      %s138 = sphi 0, %s124
      %s142 = sphi 0, %s142
      %s144 = sphi 0, %s142
      %s145 = sphi 0, %s144
      %s159 = sphi 0, %s145
      %s163 = sphi 0, %s163
      %s165 = sphi 0, %s163
      %s166 = sphi 0, %s165
      %s180 = sphi 0, %s166
      %s184 = sphi 0, %s184
      %s186 = sphi 0, %s184
      %s187 = sphi 0, %s186
      %s201 = sphi 0, %s187
      %s207 = sphi 0, %s209
      %s210 = sphi 0, %s207
      %s211 = sphi 0, %s210
      %s227 = sphi 0, %s211
      %s233 = sphi 0, %s235
      %s236 = sphi 0, %s233
      %s237 = sphi 0, %s236
      %s253 = sphi 0, %s237
    $region4: #{tpu_custom_call.1} parent=1 // loop_header_branch
      %24 = sbr.rel (%p22) target = $region8
    $region5: #{tpu_custom_call.1} parent=1 // loop_body
      %s26 = ssub.s32 %s21, 1
      %s27 = ssub.s32 %s21, 2
      %s34 = sadd.s32 1, %s29
      %p35 = scmp.ge.s32.totalorder %s34, 1
      %s36 = scalar_select %p35, 0, %s34
      %s37 = sadd.s32 1, %s28
      %s38 = scalar_select %p35, %s37, %s28
      %p39 = scmp.ge.s32.totalorder %s38, 2
      %s40 = scalar_select %p39, 0, %s38
      %s41 = ssub.s32 %s28, %s40
      %s42 = ssub.s32 %s29, %s36
      %s43 = sor.u32 %s41, %s42
      %p44 = scmp.eq.s32.totalorder %s43, 0
      %s46 = sadd.s32 %s45, 1
      %s47 = scalar_select %p44, %s45, %s46
      %p50 = pneg %p44
      %p51 = scmp.eq.s32.totalorder %s21, 1
      %p52 = por %p50, %p51
      %p53 = scmp.ne.s32.totalorder %s45, %s48
      %p54 = scmp.eq.s32.totalorder %s21, 0
      %p55 = por %p53, %p54
      %p56 = scmp.ne.s32.totalorder %s45, %s48
      %p57 = scmp.eq.s32.totalorder %s26, 1
      %p58 = por %p56, %p57
      %p59 = scmp.ne.s32.totalorder %s48, %s49
      %p60 = scmp.eq.s32.totalorder %s26, 0
      %p61 = por %p59, %p60
      %p62 = scmp.ne.s32.totalorder %s48, %s49
      %p63 = scmp.eq.s32.totalorder %s27, 1
      %p64 = por %p62, %p63
      %p66 = scmp.ne.s32.totalorder %s49, %s65
      %p67 = scmp.eq.s32.totalorder %s27, 0
      %p68 = por %p66, %p67
      %s69 = ssub.s32 %s29, %s36
      %p70 = scmp.eq.s32.totalorder %s69, 0
      %s72 = sadd.s32 %s71, 1
      %s73 = scalar_select %p70, %s71, %s72
      %p76 = pneg %p70
      %p77 = scmp.eq.s32.totalorder %s21, 1
      %p78 = por %p76, %p77
      %p79 = scmp.ne.s32.totalorder %s71, %s74
      %p80 = scmp.eq.s32.totalorder %s21, 0
      %p81 = por %p79, %p80
      %p82 = scmp.ne.s32.totalorder %s71, %s74
      %p83 = scmp.eq.s32.totalorder %s26, 1
      %p84 = por %p82, %p83
      %p85 = scmp.ne.s32.totalorder %s74, %s75
      %p86 = scmp.eq.s32.totalorder %s26, 0
      %p87 = por %p85, %p86
      %p88 = scmp.ne.s32.totalorder %s74, %s75
      %p89 = scmp.eq.s32.totalorder %s27, 1
      %p90 = por %p88, %p89
      %p92 = scmp.ne.s32.totalorder %s75, %s91
      %p93 = scmp.eq.s32.totalorder %s27, 0
      %p94 = por %p92, %p93
      %s95 = ssub.s32 %s29, %s36
      %p96 = scmp.eq.s32.totalorder %s95, 0
      %s98 = sadd.s32 %s97, 1
      %s99 = scalar_select %p96, %s97, %s98
      %p102 = pneg %p96
      %p103 = scmp.eq.s32.totalorder %s21, 1
      %p104 = por %p102, %p103
      %p105 = scmp.ne.s32.totalorder %s97, %s100
      %p106 = scmp.eq.s32.totalorder %s21, 0
      %p107 = por %p105, %p106
      %p108 = scmp.ne.s32.totalorder %s97, %s100
      %p109 = scmp.eq.s32.totalorder %s26, 1
      %p110 = por %p108, %p109
      %p111 = scmp.ne.s32.totalorder %s100, %s101
      %p112 = scmp.eq.s32.totalorder %s26, 0
      %p113 = por %p111, %p112
      %p114 = scmp.ne.s32.totalorder %s100, %s101
      %p115 = scmp.eq.s32.totalorder %s27, 1
      %p116 = por %p114, %p115
      %p118 = scmp.ne.s32.totalorder %s101, %s117
      %p119 = scmp.eq.s32.totalorder %s27, 0
      %p120 = por %p118, %p119
      %s122 = sadd.s32 %s121, 1
      %p125 = scmp.eq.s32.totalorder %s21, 1
      %p126 = scmp.ne.s32.totalorder %s121, %s123
      %p127 = scmp.eq.s32.totalorder %s21, 0
      %p128 = por %p126, %p127
      %p129 = scmp.ne.s32.totalorder %s121, %s123
      %p130 = scmp.eq.s32.totalorder %s26, 1
      %p131 = por %p129, %p130
      %p132 = scmp.ne.s32.totalorder %s123, %s124
      %p133 = scmp.eq.s32.totalorder %s26, 0
      %p134 = por %p132, %p133
      %p135 = scmp.ne.s32.totalorder %s123, %s124
      %p136 = scmp.eq.s32.totalorder %s27, 1
      %p137 = por %p135, %p136
      %p139 = scmp.ne.s32.totalorder %s124, %s138
      %p140 = scmp.eq.s32.totalorder %s27, 0
      %p141 = por %p139, %p140
      %s143 = sadd.s32 %s142, 1
      %p146 = scmp.eq.s32.totalorder %s21, 1
      %p147 = scmp.ne.s32.totalorder %s142, %s144
      %p148 = scmp.eq.s32.totalorder %s21, 0
      %p149 = por %p147, %p148
      %p150 = scmp.ne.s32.totalorder %s142, %s144
      %p151 = scmp.eq.s32.totalorder %s26, 1
      %p152 = por %p150, %p151
      %p153 = scmp.ne.s32.totalorder %s144, %s145
      %p154 = scmp.eq.s32.totalorder %s26, 0
      %p155 = por %p153, %p154
      %p156 = scmp.ne.s32.totalorder %s144, %s145
      %p157 = scmp.eq.s32.totalorder %s27, 1
      %p158 = por %p156, %p157
      %p160 = scmp.ne.s32.totalorder %s145, %s159
      %p161 = scmp.eq.s32.totalorder %s27, 0
      %p162 = por %p160, %p161
      %s164 = sadd.s32 %s163, 1
      %p167 = scmp.eq.s32.totalorder %s21, 1
      %p168 = scmp.ne.s32.totalorder %s163, %s165
      %p169 = scmp.eq.s32.totalorder %s21, 0
      %p170 = por %p168, %p169
      %p171 = scmp.ne.s32.totalorder %s163, %s165
      %p172 = scmp.eq.s32.totalorder %s26, 1
      %p173 = por %p171, %p172
      %p174 = scmp.ne.s32.totalorder %s165, %s166
      %p175 = scmp.eq.s32.totalorder %s26, 0
      %p176 = por %p174, %p175
      %p177 = scmp.ne.s32.totalorder %s165, %s166
      %p178 = scmp.eq.s32.totalorder %s27, 1
      %p179 = por %p177, %p178
      %p181 = scmp.ne.s32.totalorder %s166, %s180
      %p182 = scmp.eq.s32.totalorder %s27, 0
      %p183 = por %p181, %p182
      %s185 = sadd.s32 %s184, 1
      %p188 = scmp.eq.s32.totalorder %s21, 1
      %p189 = scmp.ne.s32.totalorder %s184, %s186
      %p190 = scmp.eq.s32.totalorder %s21, 0
      %p191 = por %p189, %p190
      %p192 = scmp.ne.s32.totalorder %s184, %s186
      %p193 = scmp.eq.s32.totalorder %s26, 1
      %p194 = por %p192, %p193
      %p195 = scmp.ne.s32.totalorder %s186, %s187
      %p196 = scmp.eq.s32.totalorder %s26, 0
      %p197 = por %p195, %p196
      %p198 = scmp.ne.s32.totalorder %s186, %s187
      %p199 = scmp.eq.s32.totalorder %s27, 1
      %p200 = por %p198, %p199
      %p202 = scmp.ne.s32.totalorder %s187, %s201
      %p203 = scmp.eq.s32.totalorder %s27, 0
      %p204 = por %p202, %p203
      %s205 = ssub.s32 %s28, %s40
      %p206 = scmp.eq.s32.totalorder %s205, 0
      %s208 = sadd.s32 %s207, 1
      %s209 = scalar_select %p206, %s207, %s208
      %p212 = pneg %p206
      %p213 = scmp.eq.s32.totalorder %s21, 1
      %p214 = por %p212, %p213
      %p215 = scmp.ne.s32.totalorder %s207, %s210
      %p216 = scmp.eq.s32.totalorder %s21, 0
      %p217 = por %p215, %p216
      %p218 = scmp.ne.s32.totalorder %s207, %s210
      %p219 = scmp.eq.s32.totalorder %s26, 1
      %p220 = por %p218, %p219
      %p221 = scmp.ne.s32.totalorder %s210, %s211
      %p222 = scmp.eq.s32.totalorder %s26, 0
      %p223 = por %p221, %p222
      %p224 = scmp.ne.s32.totalorder %s210, %s211
      %p225 = scmp.eq.s32.totalorder %s27, 1
      %p226 = por %p224, %p225
      %p228 = scmp.ne.s32.totalorder %s211, %s227
      %p229 = scmp.eq.s32.totalorder %s27, 0
      %p230 = por %p228, %p229
      %s231 = ssub.s32 %s28, %s40
      %p232 = scmp.eq.s32.totalorder %s231, 0
      %s234 = sadd.s32 %s233, 1
      %s235 = scalar_select %p232, %s233, %s234
      %p238 = pneg %p232
      %p239 = scmp.eq.s32.totalorder %s21, 1
      %p240 = por %p238, %p239
      %p241 = scmp.ne.s32.totalorder %s233, %s236
      %p242 = scmp.eq.s32.totalorder %s21, 0
      %p243 = por %p241, %p242
      %p244 = scmp.ne.s32.totalorder %s233, %s236
      %p245 = scmp.eq.s32.totalorder %s26, 1
      %p246 = por %p244, %p245
      %p247 = scmp.ne.s32.totalorder %s236, %s237
      %p248 = scmp.eq.s32.totalorder %s26, 0
      %p249 = por %p247, %p248
      %p250 = scmp.ne.s32.totalorder %s236, %s237
      %p251 = scmp.eq.s32.totalorder %s27, 1
      %p252 = por %p250, %p251
      %p254 = scmp.ne.s32.totalorder %s237, %s253
      %p255 = scmp.eq.s32.totalorder %s27, 0
      %p256 = por %p254, %p255
      %p257 = scmp.le.s32.totalorder 1, %s21
      %p258 = scmp.lt.s32.totalorder %s21, 3
      %p259 = pnand %p257, %p258
      %p260 = pneg %p259
      // Predicated region
      $region9: #{tpu_custom_call.1} parent=5 // pred_check
        _
      $region10: #{tpu_custom_call.1} parent=5 // pred_check_branch
        %262 = sbr.rel (%p259) target = $region12
      $region11: #{tpu_custom_call.1} parent=5 // pred_region
        %s263 = ssub.s32 %s21, 1
        // Predicated region
        $region13: #{tpu_custom_call.1} parent=11 // pred_check
          %p264 = pneg %p87
        $region14: #{tpu_custom_call.1} parent=11 // pred_check_branch
          %266 = sbr.rel (%p264) target = $region16
        $region15: #{tpu_custom_call.1} parent=11 // pred_region
          %s267 = smul.u32 32, %s31
          %p268 = scmp.lt.s32.totalorder %s267, 31
          %s269 = scalar_select %p268, %s267, 31
          %s270 = smul.addr %s269, 8
          %s271 = scalar_lea.vmem %s1, %s270
          %s272 = smul.u32 32, %s31
        $region16: #{tpu_custom_call.1} parent=11 // pred_fallthru
          _
        // Predicated region
        $region17: #{tpu_custom_call.1} parent=11 // pred_check
          %p273 = pneg %p113
        $region18: #{tpu_custom_call.1} parent=11 // pred_check_branch
          %275 = sbr.rel (%p273) target = $region20
        $region19: #{tpu_custom_call.1} parent=11 // pred_region
          %s276 = smul.u32 32, %s31
          %p277 = scmp.lt.s32.totalorder %s276, 31
          %s278 = scalar_select %p277, %s276, 31
          %s279 = smul.addr %s278, 8
          %s280 = scalar_lea.vmem %s2, %s279
          %s281 = smul.u32 32, %s31
        $region20: #{tpu_custom_call.1} parent=11 // pred_fallthru
          _
        // Predicated region
        $region21: #{tpu_custom_call.1} parent=11 // pred_check
          %p282 = pneg %p134
        $region22: #{tpu_custom_call.1} parent=11 // pred_check_branch
          %284 = sbr.rel (%p282) target = $region24
        $region23: #{tpu_custom_call.1} parent=11 // pred_region
          _
        $region24: #{tpu_custom_call.1} parent=11 // pred_fallthru
          _
        // Predicated region
        $region25: #{tpu_custom_call.1} parent=11 // pred_check
          %p285 = pneg %p155
        $region26: #{tpu_custom_call.1} parent=11 // pred_check_branch
          %287 = sbr.rel (%p285) target = $region28
        $region27: #{tpu_custom_call.1} parent=11 // pred_region
          _
        $region28: #{tpu_custom_call.1} parent=11 // pred_fallthru
          _
        // Predicated region
        $region29: #{tpu_custom_call.1} parent=11 // pred_check
          %p288 = pneg %p176
        $region30: #{tpu_custom_call.1} parent=11 // pred_check_branch
          %290 = sbr.rel (%p288) target = $region32
        $region31: #{tpu_custom_call.1} parent=11 // pred_region
          _
        $region32: #{tpu_custom_call.1} parent=11 // pred_fallthru
          _
        // Predicated region
        $region33: #{tpu_custom_call.1} parent=11 // pred_check
          %p291 = pneg %p197
        $region34: #{tpu_custom_call.1} parent=11 // pred_check_branch
          %293 = sbr.rel (%p291) target = $region36
        $region35: #{tpu_custom_call.1} parent=11 // pred_region
          _
        $region36: #{tpu_custom_call.1} parent=11 // pred_fallthru
          _
      $region12: #{tpu_custom_call.1} parent=5 // pred_fallthru
        _
      %p294 = scmp.lt.s32.totalorder %s21, 2
      // Predicated region
      $region37: #{tpu_custom_call.1} parent=5 // pred_check
        %p295 = pneg %p294
      $region38: #{tpu_custom_call.1} parent=5 // pred_check_branch
        %297 = sbr.rel (%p295) target = $region40
      $region39: #{tpu_custom_call.1} parent=5 // pred_region
        // Predicated region
        $region41: #{tpu_custom_call.1} parent=39 // pred_check
          %p298 = pneg %p55
        $region42: #{tpu_custom_call.1} parent=39 // pred_check_branch
          %300 = sbr.rel (%p298) target = $region44
        $region43: #{tpu_custom_call.1} parent=39 // pred_region
          %s301 = smul.u32 2, %s29
          %p302 = scmp.lt.s32.totalorder %s28, 1
          %s303 = scalar_select %p302, %s28, 1
          %p304 = scmp.lt.s32.totalorder %s301, 1
          %s305 = scalar_select %p304, %s301, 1
          %s306 = smul.addr %s303, 2
          %s307 = sadd.s32 %s305, %s306
          %s308 = smul.addr %s307, 8
          %s309 = scalar_lea.vmem %s0, %s308
          %s310 = smul.u32 2, %s29
        $region44: #{tpu_custom_call.1} parent=39 // pred_fallthru
          _
      $region40: #{tpu_custom_call.1} parent=5 // pred_fallthru
        _
      %p311 = scmp.le.s32.totalorder 1, %s21
      %p312 = scmp.lt.s32.totalorder %s21, 3
      %p313 = pnand %p311, %p312
      %p314 = pneg %p313
      // Predicated region
      $region45: #{tpu_custom_call.1} parent=5 // pred_check
        _
      $region46: #{tpu_custom_call.1} parent=5 // pred_check_branch
        %316 = sbr.rel (%p313) target = $region48
      $region47: #{tpu_custom_call.1} parent=5 // pred_region
        %s317 = ssub.s32 %s21, 1
        %s318 = smul.u32 2, %s31
        %p319 = scmp.lt.s32.totalorder %s30, 1
        %s320 = scalar_select %p319, %s30, 1
        %p321 = scmp.lt.s32.totalorder %s318, 1
        %s322 = scalar_select %p321, %s318, 1
        %s323 = smul.addr %s320, 2
        %s324 = sadd.s32 %s322, %s323
        %s325 = smul.addr %s324, 8
        %s326 = scalar_lea.vmem %s0, %s325
        %p327 = pneg %p61
        %p328 = pneg %p58
        %s329 = smul.u32 32, %s31
        %p330 = scmp.lt.s32.totalorder %s329, 31
        %s331 = scalar_select %p330, %s329, 31
        %s332 = smul.addr %s331, 8
        %s333 = scalar_lea.vmem %s1, %s332
        %p334 = pneg %p87
        %p335 = pneg %p84
        %s336 = smul.u32 32, %s31
        %p337 = scmp.lt.s32.totalorder %s336, 31
        %s338 = scalar_select %p337, %s336, 31
        %s339 = smul.addr %s338, 8
        %s340 = scalar_lea.vmem %s2, %s339
        %p341 = pneg %p113
        %p342 = pneg %p110
        %p343 = pneg %p134
        %p344 = pneg %p131
        %p345 = pneg %p155
        %p346 = pneg %p152
        %p347 = pneg %p176
        %p348 = pneg %p173
        %p349 = pneg %p197
        %p350 = pneg %p194
        %p351 = pneg %p223
        %p352 = pneg %p220
        %s353 = sand.u32 %s210, 1
        %s354 = scalar_lea.sflag [#allocation5], %s353
        %s355 = sand.u32 %s210, 1
        %s356 = smul.addr %s355, 8
        %s357 = scalar_lea.vmem [#allocation4], %s356
        %p358 = pneg %p249
        %p359 = pneg %p246
        %s360 = sand.u32 %s236, 1
        %s361 = scalar_lea.sflag [#allocation7], %s360
        %s362 = sand.u32 %s236, 1
        %s363 = smul.addr %s362, 8
        %s364 = scalar_lea.vmem [#allocation6], %s363
        %s365 = smul.u32 2, %s31
        %p366 = scmp.lt.s32.totalorder %s30, 1
        %s367 = scalar_select %p366, %s30, 1
        %p368 = scmp.lt.s32.totalorder %s365, 1
        %s369 = scalar_select %p368, %s365, 1
        %s370 = smul.addr %s367, 2
        %s371 = sadd.s32 %s369, %s370
        %s372 = smul.addr %s371, 8
        %s373 = scalar_lea.vmem %s0, %s372
        %s374 = smul.u32 2, %s31
        %s375 = smul.u32 32, %s31
        %p376 = scmp.lt.s32.totalorder %s375, 31
        %s377 = scalar_select %p376, %s375, 31
        %s378 = smul.addr %s377, 8
        %s379 = scalar_lea.vmem %s1, %s378
        %s380 = smul.u32 32, %s31
        %s381 = smul.u32 32, %s31
        %p382 = scmp.lt.s32.totalorder %s381, 31
        %s383 = scalar_select %p382, %s381, 31
        %s384 = smul.addr %s383, 8
        %s385 = scalar_lea.vmem %s2, %s384
        %s386 = smul.u32 32, %s31
        %p387 = scmp.eq.s32.totalorder %s31, 0
        // Predicated region
        $region49: #{tpu_custom_call.1} parent=47 // pred_check
          %p388 = pneg %p387
        $region50: #{tpu_custom_call.1} parent=47 // pred_check_branch
          %390 = sbr.rel (%p388) target = $region52
        $region51: #{tpu_custom_call.1} parent=47 // pred_region
          %vm391 = vcmask 130048
          %392 = vst.msk [vmem:[#allocation2] sm:$0xff] %vm391, 0.0
          %393 = vst.msk [vmem:[#allocation3] sm:$0xff] %vm391, 0.0
        $region52: #{tpu_custom_call.1} parent=47 // pred_fallthru
          _
        %v394 = vld [vmem:[%s373] sm:$0xff]
        %v395 = vld [vmem:[%s373 + $0x8] sm:$0xff]
        %v396 = vld [vmem:[#allocation2] sm:$0xff]
        %v397 = vld [vmem:[%s379] sm:$0xff]
        %v398 = vld [vmem:[%s379 + $0x8] sm:$0xff]
        %v399 = vld [vmem:[%s379 + $0x10] sm:$0xff]
        %v400 = vld [vmem:[%s379 + $0x18] sm:$0xff]
        %v401 = vld [vmem:[%s379 + $0x20] sm:$0xff]
        %v402 = vld [vmem:[%s379 + $0x28] sm:$0xff]
        %v403 = vld [vmem:[%s379 + $0x30] sm:$0xff]
        %v404 = vld [vmem:[%s379 + $0x38] sm:$0xff]
        %v405 = vld [vmem:[%s379 + $0x40] sm:$0xff]
        %v406 = vld [vmem:[%s379 + $0x48] sm:$0xff]
        %v407 = vld [vmem:[%s379 + $0x50] sm:$0xff]
        %v408 = vld [vmem:[%s379 + $0x58] sm:$0xff]
        %v409 = vld [vmem:[%s379 + $0x60] sm:$0xff]
        %v410 = vld [vmem:[%s379 + $0x68] sm:$0xff]
        %v411 = vld [vmem:[%s379 + $0x70] sm:$0xff]
        %v412 = vld [vmem:[%s379 + $0x78] sm:$0xff]
        %v413 = vld [vmem:[%s379 + $0x80] sm:$0xff]
        %v414 = vld [vmem:[%s379 + $0x88] sm:$0xff]
        %v415 = vld [vmem:[%s379 + $0x90] sm:$0xff]
        %v416 = vld [vmem:[%s379 + $0x98] sm:$0xff]
        %v417 = vld [vmem:[%s379 + $0xa0] sm:$0xff]
        %v418 = vld [vmem:[%s379 + $0xa8] sm:$0xff]
        %v419 = vld [vmem:[%s379 + $0xb0] sm:$0xff]
        %v420 = vld [vmem:[%s379 + $0xb8] sm:$0xff]
        %v421 = vld [vmem:[%s379 + $0xc0] sm:$0xff]
        %v422 = vld [vmem:[%s379 + $0xc8] sm:$0xff]
        %v423 = vld [vmem:[%s379 + $0xd0] sm:$0xff]
        %v424 = vld [vmem:[%s379 + $0xd8] sm:$0xff]
        %v425 = vld [vmem:[%s379 + $0xe0] sm:$0xff]
        %v426 = vld [vmem:[%s379 + $0xe8] sm:$0xff]
        %v427 = vld [vmem:[%s379 + $0xf0] sm:$0xff]
        %v428 = vld [vmem:[%s379 + $0xf8] sm:$0xff]
        %429 = vmatpush.msra.mxu0 %v412
        %430 = vmatpush.msra.mxu0 %v411
        %431 = vmatpush.msra.mxu0 %v410
        %432 = vmatpush.msra.mxu0 %v409
        %433 = vmatpush.msra.mxu0 %v408
        %434 = vmatpush.msra.mxu0 %v407
        %435 = vmatpush.msra.mxu0 %v406
        %436 = vmatpush.msra.mxu0 %v405
        %437 = vmatpush.msra.mxu0 %v404
        %438 = vmatpush.msra.mxu0 %v403
        %439 = vmatpush.msra.mxu0 %v402
        %440 = vmatpush.msra.mxu0 %v401
        %441 = vmatpush.msra.mxu0 %v400
        %442 = vmatpush.msra.mxu0 %v399
        %443 = vmatpush.msra.mxu0 %v398
        %444 = vmatpush.msra.mxu0 %v397
        %445 = vmatmul.f32.gmra.mxu0 %v394
        %v446 = vpop.f32.mrf.mxu0
        %v447 = vadd.f32 0.0, %v446
        %448 = vdwg.mxu0
        %449 = vmatpush.msra.mxu0 %v428
        %450 = vmatpush.msra.mxu0 %v427
        %451 = vmatpush.msra.mxu0 %v426
        %452 = vmatpush.msra.mxu0 %v425
        %453 = vmatpush.msra.mxu0 %v424
        %454 = vmatpush.msra.mxu0 %v423
        %455 = vmatpush.msra.mxu0 %v422
        %456 = vmatpush.msra.mxu0 %v421
        %457 = vmatpush.msra.mxu0 %v420
        %458 = vmatpush.msra.mxu0 %v419
        %459 = vmatpush.msra.mxu0 %v418
        %460 = vmatpush.msra.mxu0 %v417
        %461 = vmatpush.msra.mxu0 %v416
        %462 = vmatpush.msra.mxu0 %v415
        %463 = vmatpush.msra.mxu0 %v414
        %464 = vmatpush.msra.mxu0 %v413
        %465 = vmatmul.f32.gmra.mxu0 %v395
        %v466 = vpop.f32.mrf.mxu0
        %v467 = vadd.f32 %v447, %v466
        %468 = vdwg.mxu0
        %v469 = vadd.f32 %v396, %v467
        %vm470 = vcmask 130048
        %471 = vst.msk [vmem:[#allocation2] sm:$0xff] %vm470, %v469
        %v472 = vld [vmem:[#allocation3] sm:$0xff]
        %v473 = vld [vmem:[%s385] sm:$0xff]
        %v474 = vld [vmem:[%s385 + $0x8] sm:$0xff]
        %v475 = vld [vmem:[%s385 + $0x10] sm:$0xff]
        %v476 = vld [vmem:[%s385 + $0x18] sm:$0xff]
        %v477 = vld [vmem:[%s385 + $0x20] sm:$0xff]
        %v478 = vld [vmem:[%s385 + $0x28] sm:$0xff]
        %v479 = vld [vmem:[%s385 + $0x30] sm:$0xff]
        %v480 = vld [vmem:[%s385 + $0x38] sm:$0xff]
        %v481 = vld [vmem:[%s385 + $0x40] sm:$0xff]
        %v482 = vld [vmem:[%s385 + $0x48] sm:$0xff]
        %v483 = vld [vmem:[%s385 + $0x50] sm:$0xff]
        %v484 = vld [vmem:[%s385 + $0x58] sm:$0xff]
        %v485 = vld [vmem:[%s385 + $0x60] sm:$0xff]
        %v486 = vld [vmem:[%s385 + $0x68] sm:$0xff]
        %v487 = vld [vmem:[%s385 + $0x70] sm:$0xff]
        %v488 = vld [vmem:[%s385 + $0x78] sm:$0xff]
        %v489 = vld [vmem:[%s385 + $0x80] sm:$0xff]
        %v490 = vld [vmem:[%s385 + $0x88] sm:$0xff]
        %v491 = vld [vmem:[%s385 + $0x90] sm:$0xff]
        %v492 = vld [vmem:[%s385 + $0x98] sm:$0xff]
        %v493 = vld [vmem:[%s385 + $0xa0] sm:$0xff]
        %v494 = vld [vmem:[%s385 + $0xa8] sm:$0xff]
        %v495 = vld [vmem:[%s385 + $0xb0] sm:$0xff]
        %v496 = vld [vmem:[%s385 + $0xb8] sm:$0xff]
        %v497 = vld [vmem:[%s385 + $0xc0] sm:$0xff]
        %v498 = vld [vmem:[%s385 + $0xc8] sm:$0xff]
        %v499 = vld [vmem:[%s385 + $0xd0] sm:$0xff]
        %v500 = vld [vmem:[%s385 + $0xd8] sm:$0xff]
        %v501 = vld [vmem:[%s385 + $0xe0] sm:$0xff]
        %v502 = vld [vmem:[%s385 + $0xe8] sm:$0xff]
        %v503 = vld [vmem:[%s385 + $0xf0] sm:$0xff]
        %v504 = vld [vmem:[%s385 + $0xf8] sm:$0xff]
        %505 = vmatpush.msra.mxu0 %v488
        %506 = vmatpush.msra.mxu0 %v487
        %507 = vmatpush.msra.mxu0 %v486
        %508 = vmatpush.msra.mxu0 %v485
        %509 = vmatpush.msra.mxu0 %v484
        %510 = vmatpush.msra.mxu0 %v483
        %511 = vmatpush.msra.mxu0 %v482
        %512 = vmatpush.msra.mxu0 %v481
        %513 = vmatpush.msra.mxu0 %v480
        %514 = vmatpush.msra.mxu0 %v479
        %515 = vmatpush.msra.mxu0 %v478
        %516 = vmatpush.msra.mxu0 %v477
        %517 = vmatpush.msra.mxu0 %v476
        %518 = vmatpush.msra.mxu0 %v475
        %519 = vmatpush.msra.mxu0 %v474
        %520 = vmatpush.msra.mxu0 %v473
        %521 = vmatmul.f32.gmra.mxu0 %v394
        %v522 = vpop.f32.mrf.mxu0
        %v523 = vadd.f32 0.0, %v522
        %524 = vdwg.mxu0
        %525 = vmatpush.msra.mxu0 %v504
        %526 = vmatpush.msra.mxu0 %v503
        %527 = vmatpush.msra.mxu0 %v502
        %528 = vmatpush.msra.mxu0 %v501
        %529 = vmatpush.msra.mxu0 %v500
        %530 = vmatpush.msra.mxu0 %v499
        %531 = vmatpush.msra.mxu0 %v498
        %532 = vmatpush.msra.mxu0 %v497
        %533 = vmatpush.msra.mxu0 %v496
        %534 = vmatpush.msra.mxu0 %v495
        %535 = vmatpush.msra.mxu0 %v494
        %536 = vmatpush.msra.mxu0 %v493
        %537 = vmatpush.msra.mxu0 %v492
        %538 = vmatpush.msra.mxu0 %v491
        %539 = vmatpush.msra.mxu0 %v490
        %540 = vmatpush.msra.mxu0 %v489
        %541 = vmatmul.f32.gmra.mxu0 %v395
        %v542 = vpop.f32.mrf.mxu0
        %v543 = vadd.f32 %v523, %v542
        %544 = vdwg.mxu0
        %v545 = vadd.f32 %v472, %v543
        %546 = vst.msk [vmem:[#allocation3] sm:$0xff] %vm470, %v545
        // Predicated region
        $region53: #{tpu_custom_call.1} parent=47 // pred_check
          %p547 = pneg %p387
        $region54: #{tpu_custom_call.1} parent=47 // pred_check_branch
          %549 = sbr.rel (%p547) target = $region56
        $region55: #{tpu_custom_call.1} parent=47 // pred_region
          %v550 = vld [vmem:[#allocation2] sm:$0xff]
          %v551 = vmul.f32 %v550, 0.0625
          %v552 = vld [vmem:[#allocation3] sm:$0xff]
          %v553 = vmul.f32 %v552, 0.0625
          %v554 = vld [vmem:[%s3] sm:$0xf]
          %v555 = vld [vmem:[%s4] sm:$0xf]
          %557 = vset.pattern.permute.xlu0 0
          %558 = vperm.xlu0 %557, %v555
          %v559 = vpop.permute.xlu0 %558
          %vm561 = vcmask 64512
          %v563 = vsel %vm561, %v554, 0
          %565 = vmatpush.msra.mxu0 0.0
          %566 = vmatpush.msra.mxu0 0.0
          %567 = vmatpush.msra.mxu0 0.0
          %568 = vmatpush.msra.mxu0 0.0
          %569 = vmatpush.msra.mxu0 0.0
          %570 = vmatpush.msra.mxu0 0.0
          %571 = vmatpush.msra.mxu0 0.0
          %572 = vmatpush.msra.mxu0 0.0
          %573 = vmatpush.msra.mxu0 0.0
          %574 = vmatpush.msra.mxu0 0.0
          %575 = vmatpush.msra.mxu0 0.0
          %576 = vmatpush.msra.mxu0 0.0
          %577 = vmatpush.msra.mxu0 0.0
          %578 = vmatpush.msra.mxu0 0.0
          %579 = vmatpush.msra.mxu0 0.0
          %580 = vmatpush.msra.mxu0 %v553
          %581 = vmatmul.f32.gmra.mxu0 %v563
          %v582 = vpop.f32.mrf.mxu0
          %v583 = vadd.f32 %v559, %v582
          %584 = vdwg.mxu0
          %v585 = vadd.f32 %v583, 3.0
          %v586 = vmax.f32 %v585, 0.0
          %v587 = vmin.f32 %v586, 6.0
          %v588 = vmul.f32 %v583, %v587
          %v589 = vmul.f32 %v588, 0.16666667
          %v590 = vld [vmem:[%s5] sm:$0xff]
          %v591 = vld [vmem:[%s6] sm:$0xff]
          %593 = vset.pattern.permute.xlu0 0
          %594 = vperm.xlu0 %593, %v591
          %v595 = vpop.permute.xlu0 %594
          %vm597 = vcmask 31744
          %v599 = vsel %vm597, %v590, 0
          %vm601 = vcmask 1043456
          %v603 = vsel %vm601, %v589, 0
          %605 = vmatpush.msra.mxu0 0.0
          %606 = vmatpush.msra.mxu0 0.0
          %607 = vmatpush.msra.mxu0 0.0
          %608 = vmatpush.msra.mxu0 0.0
          %609 = vmatpush.msra.mxu0 0.0
          %610 = vmatpush.msra.mxu0 0.0
          %611 = vmatpush.msra.mxu0 0.0
          %612 = vmatpush.msra.mxu0 0.0
          %613 = vmatpush.msra.mxu0 0.0
          %614 = vmatpush.msra.mxu0 0.0
          %615 = vmatpush.msra.mxu0 0.0
          %616 = vmatpush.msra.mxu0 0.0
          %617 = vmatpush.msra.mxu0 0.0
          %618 = vmatpush.msra.mxu0 0.0
          %619 = vmatpush.msra.mxu0 0.0
          %620 = vmatpush.msra.mxu0 %v603
          %621 = vmatmul.f32.gmra.mxu0 %v599
          %v622 = vpop.f32.mrf.mxu0
          %v623 = vadd.f32 %v595, %v622
          %624 = vdwg.mxu0
          %v625 = vxor.u32 %v623, 2147483648
          %v626 = vmul.f32 %v625, 1.442695
          %v627 = vpow.pop %v626
          %v628 = vadd.f32 %v627, 1.0
          %v629 = vrcp.pop %v628
          %v630 = vmul.f32 %v628, %v629
          %v631 = vsub.f32 1.0, %v630
          %v632 = vmul.f32 %v629, %v631
          %v633 = vadd.f32 %v629, %v632
          %vm634 = vweird.f32 %v628
          %vm635 = vweird.f32 %v629
          %vm636 = vmor %vm634, %vm635
          %v637 = vsel %vm636, %v629, %v633
          %v638 = vand.u32 2147483647, %v628
          %vm639 = vcmp.eq.f32.partialorder %v638, 8.507059e+37
          %v640 = vand.u32 %v628, 2147483648
          %v641 = vor.u32 1.1754944e-38, %v640
          %v642 = vsel %vm639, %v641, %v637
          %v643 = vmul.f32 1.0, %v642
          %644 = vst.msk [vmem:[%s357] sm:$0xff] %vm470, %v643
          %v645 = vld [vmem:[%s3] sm:$0xf]
          %v646 = vld [vmem:[%s4] sm:$0xf]
          %648 = vset.pattern.permute.xlu0 0
          %649 = vperm.xlu0 %648, %v646
          %v650 = vpop.permute.xlu0 %649
          %v653 = vsel %vm561, %v645, 0
          %655 = vmatpush.msra.mxu0 0.0
          %656 = vmatpush.msra.mxu0 0.0
          %657 = vmatpush.msra.mxu0 0.0
          %658 = vmatpush.msra.mxu0 0.0
          %659 = vmatpush.msra.mxu0 0.0
          %660 = vmatpush.msra.mxu0 0.0
          %661 = vmatpush.msra.mxu0 0.0
          %662 = vmatpush.msra.mxu0 0.0
          %663 = vmatpush.msra.mxu0 0.0
          %664 = vmatpush.msra.mxu0 0.0
          %665 = vmatpush.msra.mxu0 0.0
          %666 = vmatpush.msra.mxu0 0.0
          %667 = vmatpush.msra.mxu0 0.0
          %668 = vmatpush.msra.mxu0 0.0
          %669 = vmatpush.msra.mxu0 0.0
          %670 = vmatpush.msra.mxu0 %v551
          %671 = vmatmul.f32.gmra.mxu0 %v653
          %v672 = vpop.f32.mrf.mxu0
          %v673 = vadd.f32 %v650, %v672
          %674 = vdwg.mxu0
          %v675 = vadd.f32 %v673, 3.0
          %v676 = vmax.f32 %v675, 0.0
          %v677 = vmin.f32 %v676, 6.0
          %v678 = vmul.f32 %v673, %v677
          %v679 = vmul.f32 %v678, 0.16666667
          %v680 = vld [vmem:[%s5] sm:$0xff]
          %v681 = vld [vmem:[%s6] sm:$0xff]
          %683 = vset.pattern.permute.xlu0 0
          %684 = vperm.xlu0 %683, %v681
          %v685 = vpop.permute.xlu0 %684
          %v688 = vsel %vm597, %v680, 0
          %v691 = vsel %vm601, %v679, 0
          %693 = vmatpush.msra.mxu0 0.0
          %694 = vmatpush.msra.mxu0 0.0
          %695 = vmatpush.msra.mxu0 0.0
          %696 = vmatpush.msra.mxu0 0.0
          %697 = vmatpush.msra.mxu0 0.0
          %698 = vmatpush.msra.mxu0 0.0
          %699 = vmatpush.msra.mxu0 0.0
          %700 = vmatpush.msra.mxu0 0.0
          %701 = vmatpush.msra.mxu0 0.0
          %702 = vmatpush.msra.mxu0 0.0
          %703 = vmatpush.msra.mxu0 0.0
          %704 = vmatpush.msra.mxu0 0.0
          %705 = vmatpush.msra.mxu0 0.0
          %706 = vmatpush.msra.mxu0 0.0
          %707 = vmatpush.msra.mxu0 0.0
          %708 = vmatpush.msra.mxu0 %v691
          %709 = vmatmul.f32.gmra.mxu0 %v688
          %v710 = vpop.f32.mrf.mxu0
          %v711 = vadd.f32 %v685, %v710
          %712 = vdwg.mxu0
          %v713 = vxor.u32 %v711, 2147483648
          %v714 = vmul.f32 %v713, 1.442695
          %v715 = vpow.pop %v714
          %v716 = vadd.f32 %v715, 1.0
          %v717 = vrcp.pop %v716
          %v718 = vmul.f32 %v716, %v717
          %v719 = vsub.f32 1.0, %v718
          %v720 = vmul.f32 %v717, %v719
          %v721 = vadd.f32 %v717, %v720
          %vm722 = vweird.f32 %v716
          %vm723 = vweird.f32 %v717
          %vm724 = vmor %vm722, %vm723
          %v725 = vsel %vm724, %v717, %v721
          %v726 = vand.u32 2147483647, %v716
          %vm727 = vcmp.eq.f32.partialorder %v726, 8.507059e+37
          %v728 = vand.u32 %v716, 2147483648
          %v729 = vor.u32 1.1754944e-38, %v728
          %v730 = vsel %vm727, %v729, %v725
          %v731 = vmul.f32 1.0, %v730
          %732 = vst.msk [vmem:[%s364] sm:$0xff] %vm470, %v731
        $region56: #{tpu_custom_call.1} parent=47 // pred_fallthru
          _
        %s733 = sand.u32 %s210, 1
        %s734 = scalar_lea.sflag [#allocation5], %s733
        %s735 = sand.u32 %s210, 1
        %s736 = smul.addr %s735, 8
        %s737 = scalar_lea.vmem [#allocation4], %s736
        %s738 = sand.u32 %s236, 1
        %s739 = scalar_lea.sflag [#allocation7], %s738
        %s740 = sand.u32 %s236, 1
        %s741 = smul.addr %s740, 8
        %s742 = scalar_lea.vmem [#allocation6], %s741
        // Predicated region
        $region57: #{tpu_custom_call.1} parent=47 // pred_check
          %p743 = pneg %p220
        $region58: #{tpu_custom_call.1} parent=47 // pred_check_branch
          %745 = sbr.rel (%p743) target = $region60
        $region59: #{tpu_custom_call.1} parent=47 // pred_region
          %747 = vsyncadd %s734, 0
          %s748 = smul.addr %s30, 8
          %s749 = scalar_lea.hbm %s7, %s748
          %s751 = sshll.u32 %s737, 4
          %s752 = int_to_ptr.vmem [resolvable:$true] %s751
          %s753 = sshll.u32 %s749, 4
          %s754 = int_to_ptr.hbm [resolvable:$true] %s753
          %756 = dma.vmem_to_hbm [thread:$0]  %s752, 128, %s754, %s734
        $region60: #{tpu_custom_call.1} parent=47 // pred_fallthru
          _
        // Predicated region
        $region61: #{tpu_custom_call.1} parent=47 // pred_check
          %p757 = pneg %p246
        $region62: #{tpu_custom_call.1} parent=47 // pred_check_branch
          %759 = sbr.rel (%p757) target = $region64
        $region63: #{tpu_custom_call.1} parent=47 // pred_region
          %761 = vsyncadd %s739, 0
          %s762 = smul.addr %s30, 8
          %s763 = scalar_lea.hbm %s8, %s762
          %s765 = sshll.u32 %s742, 4
          %s766 = int_to_ptr.vmem [resolvable:$true] %s765
          %s767 = sshll.u32 %s763, 4
          %s768 = int_to_ptr.hbm [resolvable:$true] %s767
          %770 = dma.vmem_to_hbm [thread:$0]  %s766, 128, %s768, %s739
        $region64: #{tpu_custom_call.1} parent=47 // pred_fallthru
          _
      $region48: #{tpu_custom_call.1} parent=5 // pred_fallthru
        _
      %p771 = scmp.le.s32.totalorder 2, %s21
      // Predicated region
      $region65: #{tpu_custom_call.1} parent=5 // pred_check
        %p772 = pneg %p771
      $region66: #{tpu_custom_call.1} parent=5 // pred_check_branch
        %774 = sbr.rel (%p772) target = $region68
      $region67: #{tpu_custom_call.1} parent=5 // pred_region
        %s775 = ssub.s32 %s21, 2
        // Predicated region
        $region69: #{tpu_custom_call.1} parent=67 // pred_check
          %p776 = pneg %p226
        $region70: #{tpu_custom_call.1} parent=67 // pred_check_branch
          %778 = sbr.rel (%p776) target = $region72
        $region71: #{tpu_custom_call.1} parent=67 // pred_region
          %s779 = sand.u32 %s211, 1
          %s780 = scalar_lea.sflag [#allocation5], %s779
          %s781 = sand.u32 %s211, 1
          %s782 = smul.addr %s781, 8
          %s783 = scalar_lea.vmem [#allocation4], %s782
          %785 = dma.done %s780, 128
        $region72: #{tpu_custom_call.1} parent=67 // pred_fallthru
          _
        // Predicated region
        $region73: #{tpu_custom_call.1} parent=67 // pred_check
          %p786 = pneg %p252
        $region74: #{tpu_custom_call.1} parent=67 // pred_check_branch
          %788 = sbr.rel (%p786) target = $region76
        $region75: #{tpu_custom_call.1} parent=67 // pred_region
          %s789 = sand.u32 %s237, 1
          %s790 = scalar_lea.sflag [#allocation7], %s789
          %s791 = sand.u32 %s237, 1
          %s792 = smul.addr %s791, 8
          %s793 = scalar_lea.vmem [#allocation6], %s792
          %795 = dma.done %s790, 128
        $region76: #{tpu_custom_call.1} parent=67 // pred_fallthru
          _
      $region68: #{tpu_custom_call.1} parent=5 // pred_fallthru
        _
    $region6: #{tpu_custom_call.1} parent=1 // loop_footer
      %s25 = sadd.s32 1, %s21
    $region7: #{tpu_custom_call.1} parent=1 // loop_footer_branch
      %20 = sbr.rel target = $region3
    $region8: #{tpu_custom_call.1} parent=1 // loop_exit
      _
    %796 = vsyncpa [#allocation5], 1
    %s797 = scalar_lea.sflag [#allocation5], 1
    %798 = vsyncpa %s797, 1
    %799 = vsyncpa [#allocation7], 1
    %s800 = scalar_lea.sflag [#allocation7], 1
    %801 = vsyncpa %s800, 1

</llo_original>
